<compile_context>
chip_gen: v5e
topology: v5e:2x2
jax: 0.10.0
libtpu: 0.0.40
codegen_flags: <defaults>
</compile_context>

<pallas_src>
import math

import jax
import jax.numpy as jnp
from jax.experimental import pallas as pl
from jax.experimental.pallas import tpu as pltpu

# ----------------------------- hyper-params ---------------------------------
STATE_SIZE = 8
ACTION_SIZE = 4
H_DIM = 128
L = 7                                   # positional mapping levels
SCALE = 1.0
MAPPED_DIM = STATE_SIZE * (2 * L + 1)   # 8 * 15 = 120
LANES = 128                             # padded mapped dim / output lane width
FUSED = 2 * H_DIM                       # 256: [actor | critic] fused width

# packed-slab row offsets (all multiples of 8 -> aligned sublane slices)
_W1_OFF = 0                             # (128, 256)
_W2_OFF = _W1_OFF + LANES               # (256, 256) block-diagonal
_W3_OFF = _W2_OFF + FUSED               # (256, 256) block-diagonal
_W4_OFF = _W3_OFF + FUSED               # (256, 256); only cols 0..127 used
_B_OFF = _W4_OFF + FUSED                # (8, 256): rows = b1,b2,b3,b4,0,0,0,0
SLAB_ROWS = _B_OFF + 8                  # 904


# ------------------------------- kernel -------------------------------------
def _actor_critic_kernel(xt_ref, w_ref, out_ref):
    lane = jax.lax.broadcasted_iota(jnp.int32, (1, LANES), 1)
    xt = xt_ref[...]                                    # (1,128): state tiled 16x
    xs = xt * SCALE if SCALE != 1.0 else xt

    # ---- positional mapping, vectorised ----
    # per-lane frequency: lanes [8+8i,16+8i) (sin) and [64+8i,72+8i) (cos)
    # get (2^i)*pi; lanes 0..7 (identity) and 120..127 (pad) get 0.
    freq = jnp.zeros((1, LANES), jnp.float32)
    for i in range(L):
        f = (2.0 ** i) * math.pi
        sel = (((lane >= 8 + 8 * i) & (lane < 16 + 8 * i)) |
               ((lane >= 64 + 8 * i) & (lane < 72 + 8 * i)))
        freq = jnp.where(sel, f, freq)
    args = freq * xs
    s = jnp.sin(args)                                   # one EUP pass
    c = jnp.cos(args)                                   # one EUP pass
    # mapped layout: [x (8) | sin_0..sin_6 (56) | cos_0..cos_6 (56) | 0 (8)]
    xm = jnp.where(lane < STATE_SIZE, xs,
                   jnp.where(lane < STATE_SIZE + STATE_SIZE * L, s,
                             jnp.where(lane < MAPPED_DIM, c, 0.0)))
    if SCALE != 1.0:
        xm = xm * (1.0 / SCALE)

    def leaky(v):                                       # nn.LeakyReLU(0.2)
        return jnp.where(v > 0, v, 0.2 * v)

    # ---- fused actor+critic MLP (4 dependent matmuls) ----
    w1 = w_ref[_W1_OFF:_W1_OFF + LANES, :]              # (128, 256)
    w2 = w_ref[_W2_OFF:_W2_OFF + FUSED, :]              # (256, 256)
    w3 = w_ref[_W3_OFF:_W3_OFF + FUSED, :]              # (256, 256)
    w4 = w_ref[_W4_OFF:_W4_OFF + FUSED, 0:LANES]        # (256, 128)
    bias = w_ref[_B_OFF:_B_OFF + 8, :]                  # (8, 256)
    b1 = bias[0:1, :]
    b2 = bias[1:2, :]
    b3 = bias[2:3, :]
    b4 = bias[3:4, 0:LANES]

    h = leaky(jnp.dot(xm, w1, preferred_element_type=jnp.float32) + b1)  # (1,256)
    h = leaky(jnp.dot(h, w2, preferred_element_type=jnp.float32) + b2)   # (1,256)
    h = leaky(jnp.dot(h, w3, preferred_element_type=jnp.float32) + b3)   # (1,256)
    z = jnp.dot(h, w4, preferred_element_type=jnp.float32) + b4          # (1,128)
    # z lanes 0..3: actor logits, lane 4: critic value, lanes 5..127: 0

    # ---- masked softmax over lanes 0..3, value passthrough on lane 4 ----
    is_logit = lane < ACTION_SIZE
    masked = jnp.where(is_logit, z, jnp.float32(-1e30))
    m = jnp.max(masked, axis=-1, keepdims=True)
    e = jnp.exp(masked - m)                             # exactly 0 off the logits
    inv = pl.reciprocal(jnp.sum(e, axis=-1, keepdims=True), approx=True)
    probs = e * inv
    # lane-dense single output: [probs(4) | value(1) | zeros(123)]
    out_ref[...] = jnp.where(lane == ACTION_SIZE, z, probs)


# ------------------------------- wrapper -------------------------------------
_VMEM_SPEC = pl.BlockSpec(memory_space=pltpu.MemorySpace.VMEM)


@jax.jit
def actor_critic_forward(x, slab):
    """x: (STATE_SIZE,) or (1, STATE_SIZE) float32; slab: pack_params() output."""
    x = jnp.asarray(x, jnp.float32).reshape(1, -1)      # like x.view([1,-1])
    xt = jnp.tile(x, (1, LANES // STATE_SIZE))          # (1,128) lane-dense input
    out = pl.pallas_call(
        _actor_critic_kernel,
        in_specs=[_VMEM_SPEC, _VMEM_SPEC],
        out_specs=_VMEM_SPEC,
        out_shape=jax.ShapeDtypeStruct((1, LANES), jnp.float32),
    )(xt, slab)
    probs = out[:, :ACTION_SIZE]
    value = out[:, ACTION_SIZE:ACTION_SIZE + 1]
    return probs, value


# --------------------------- parameter packing --------------------------------
def _permute_map_rows(w):
    """Reorder layer-1 rows from the PyTorch mapping order
    [x, sin0, cos0, sin1, cos1, ...] to the kernel layout
    [x, sin0..sin6, cos0..cos6] and zero-pad 120 -> 128 rows."""
    n_out = w.shape[1]
    sin_rows = [w[STATE_SIZE + 2 * i * STATE_SIZE:
                  STATE_SIZE + (2 * i + 1) * STATE_SIZE] for i in range(L)]
    cos_rows = [w[STATE_SIZE + (2 * i + 1) * STATE_SIZE:
                  STATE_SIZE + (2 * i + 2) * STATE_SIZE] for i in range(L)]
    pad = jnp.zeros((LANES - MAPPED_DIM, n_out), w.dtype)
    return jnp.concatenate([w[:STATE_SIZE]] + sin_rows + cos_rows + [pad], axis=0)


def pack_params(p):
    """Pack all actor/critic weights + biases into one (904, 256) f32 slab."""
    f32 = jnp.float32
    w1f = jnp.concatenate([_permute_map_rows(p["aw1"]),
                           _permute_map_rows(p["cw1"])], axis=1)          # (128,256)

    def block_diag(a, c):
        z = jnp.zeros((H_DIM, H_DIM), f32)
        return jnp.concatenate([jnp.concatenate([a, z], axis=1),
                                jnp.concatenate([z, c], axis=1)], axis=0)  # (256,256)

    # NOTE: on v5e (128-wide MXU) these could stay as two independent 128x128
    # matmuls; the fused block-diagonal form is kept for all chips for simplicity.
    w2f = block_diag(p["aw2"], p["cw2"])
    w3f = block_diag(p["aw3"], p["cw3"])

    w4f = jnp.zeros((FUSED, FUSED), f32)
    w4f = w4f.at[:H_DIM, :ACTION_SIZE].set(p["aw4"])
    w4f = w4f.at[H_DIM:, ACTION_SIZE:ACTION_SIZE + 1].set(p["cw4"])       # (256,256)

    b1f = jnp.concatenate([p["ab1"], p["cb1"]], axis=1)                   # (1,256)
    b2f = jnp.concatenate([p["ab2"], p["cb2"]], axis=1)
    b3f = jnp.concatenate([p["ab3"], p["cb3"]], axis=1)
    b4f = jnp.zeros((1, FUSED), f32)
    b4f = b4f.at[0, :ACTION_SIZE].set(p["ab4"][0])
    b4f = b4f.at[0, ACTION_SIZE].set(p["cb4"][0, 0])
    bias_block = jnp.concatenate(
        [b1f, b2f, b3f, b4f, jnp.zeros((4, FUSED), f32)], axis=0)         # (8,256)

    slab = jnp.concatenate([w1f, w2f, w3f, w4f, bias_block], axis=0)
    assert slab.shape == (SLAB_ROWS, FUSED)
    return slab


# ------------------------- deterministic param init ---------------------------
def _init_linear(key, fan_in, fan_out):
    # mimic torch.nn.Linear default init: U(-1/sqrt(fan_in), 1/sqrt(fan_in))
    kw, kb = jax.random.split(key)
    bound = 1.0 / math.sqrt(fan_in)
    w = jax.random.uniform(kw, (fan_in, fan_out), jnp.float32, -bound, bound)
    b = jax.random.uniform(kb, (1, fan_out), jnp.float32, -bound, bound)
    return w, b


def init_params(key):
    keys = jax.random.split(key, 8)
    p = {}
    # actor MLP: mapped -> h -> h -> h -> action_size
    p["aw1"], p["ab1"] = _init_linear(keys[0], MAPPED_DIM, H_DIM)
    p["aw2"], p["ab2"] = _init_linear(keys[1], H_DIM, H_DIM)
    p["aw3"], p["ab3"] = _init_linear(keys[2], H_DIM, H_DIM)
    p["aw4"], p["ab4"] = _init_linear(keys[3], H_DIM, ACTION_SIZE)
    # critic MLP: mapped -> h -> h -> h -> 1
    p["cw1"], p["cb1"] = _init_linear(keys[4], MAPPED_DIM, H_DIM)
    p["cw2"], p["cb2"] = _init_linear(keys[5], H_DIM, H_DIM)
    p["cw3"], p["cb3"] = _init_linear(keys[6], H_DIM, H_DIM)
    p["cw4"], p["cb4"] = _init_linear(keys[7], H_DIM, 1)
    return p


# ---------------------------- pure-JAX reference ------------------------------
def reference_forward(x, p):
    x = jnp.asarray(x, jnp.float32).reshape(1, -1) * SCALE
    parts = [x]
    for i in range(L):
        f = (2.0 ** i) * math.pi
        parts.append(jnp.sin(f * x))
        parts.append(jnp.cos(f * x))
    xm = jnp.concatenate(parts, axis=-1) / SCALE

    def leaky(v):
        return jnp.where(v > 0, v, 0.2 * v)

    def mlp(w1, b1, w2, b2, w3, b3, w4, b4):
        h = leaky(xm @ w1 + b1)
        h = leaky(h @ w2 + b2)
        h = leaky(h @ w3 + b3)
        return h @ w4 + b4

    logits = mlp(p["aw1"], p["ab1"], p["aw2"], p["ab2"],
                 p["aw3"], p["ab3"], p["aw4"], p["ab4"])
    probs = jax.nn.softmax(logits, axis=-1)
    value = mlp(p["cw1"], p["cb1"], p["cw2"], p["cb2"],
                p["cw3"], p["cb3"], p["cw4"], p["cb4"])
    return probs, value


# --------------------------------- main ---------------------------------------
if __name__ == "__main__":
    key = jax.random.PRNGKey(0)
    k_params, k_state = jax.random.split(key)
    params = init_params(k_params)
    slab = pack_params(params)                  # one-time packing into a single slab

    # state vector, reshaped to (1, state_size) like ActorCritic.get_action
    state = jax.random.normal(k_state, (STATE_SIZE,), jnp.float32)

    probs, value = actor_critic_forward(state, slab)
    jax.block_until_ready((probs, value))

    # sanity: shapes, valid distribution, agreement with the pure-JAX reference
    assert probs.shape == (1, ACTION_SIZE)
    assert value.shape == (1, 1)
    assert bool(jnp.isclose(jnp.sum(probs), 1.0, atol=5e-3))
    probs_ref, value_ref = reference_forward(state, params)
    assert bool(jnp.allclose(probs, probs_ref, rtol=2e-2, atol=2e-3))
    assert bool(jnp.allclose(value, value_ref, rtol=2e-2, atol=2e-2))

    print("KERNEL_OK")
</pallas_src>

<mosaic_0001>
module attributes {stable_mosaic.version = 11 : i64} {
  func.func @_actor_critic_kernel(%arg0: memref<1x128xf32, #tpu.memory_space<vmem>>, %arg1: memref<904x256xf32, #tpu.memory_space<vmem>>, %arg2: memref<1x128xf32, #tpu.memory_space<vmem>>) attributes {dimension_semantics = [], scalar_prefetch = 0 : i64, scratch_operands = 0 : i64, tpu.core_type = #tpu.core_type<tc>} {
    %0 = tpu.iota {dimensions = array<i32: 1>} : vector<1x128xi32>
    %c0 = arith.constant 0 : index
    %c0_0 = arith.constant 0 : index
    %1 = vector.load %arg0[%c0, %c0_0] : memref<1x128xf32, #tpu.memory_space<vmem>>, vector<1x128xf32>
    %cst = arith.constant 0.000000e+00 : f32
    %2 = vector.broadcast %cst : f32 to vector<1x128xf32>
    %c8_i32 = arith.constant 8 : i32
    %3 = vector.broadcast %c8_i32 : i32 to vector<1x128xi32>
    %4 = arith.cmpi sge, %0, %3 : vector<1x128xi32>
    %c16_i32 = arith.constant 16 : i32
    %5 = vector.broadcast %c16_i32 : i32 to vector<1x128xi32>
    %6 = arith.cmpi slt, %0, %5 : vector<1x128xi32>
    %7 = arith.andi %4, %6 : vector<1x128xi1>
    %c64_i32 = arith.constant 64 : i32
    %8 = vector.broadcast %c64_i32 : i32 to vector<1x128xi32>
    %9 = arith.cmpi sge, %0, %8 : vector<1x128xi32>
    %c72_i32 = arith.constant 72 : i32
    %10 = vector.broadcast %c72_i32 : i32 to vector<1x128xi32>
    %11 = arith.cmpi slt, %0, %10 : vector<1x128xi32>
    %12 = arith.andi %9, %11 : vector<1x128xi1>
    %13 = arith.ori %7, %12 : vector<1x128xi1>
    %cst_1 = arith.constant 3.14159274 : f32
    %14 = vector.broadcast %cst_1 : f32 to vector<1x128xf32>
    %15 = arith.select %13, %14, %2 : vector<1x128xi1>, vector<1x128xf32>
    %c16_i32_2 = arith.constant 16 : i32
    %16 = vector.broadcast %c16_i32_2 : i32 to vector<1x128xi32>
    %17 = arith.cmpi sge, %0, %16 : vector<1x128xi32>
    %c24_i32 = arith.constant 24 : i32
    %18 = vector.broadcast %c24_i32 : i32 to vector<1x128xi32>
    %19 = arith.cmpi slt, %0, %18 : vector<1x128xi32>
    %20 = arith.andi %17, %19 : vector<1x128xi1>
    %c72_i32_3 = arith.constant 72 : i32
    %21 = vector.broadcast %c72_i32_3 : i32 to vector<1x128xi32>
    %22 = arith.cmpi sge, %0, %21 : vector<1x128xi32>
    %c80_i32 = arith.constant 80 : i32
    %23 = vector.broadcast %c80_i32 : i32 to vector<1x128xi32>
    %24 = arith.cmpi slt, %0, %23 : vector<1x128xi32>
    %25 = arith.andi %22, %24 : vector<1x128xi1>
    %26 = arith.ori %20, %25 : vector<1x128xi1>
    %cst_4 = arith.constant 6.28318548 : f32
    %27 = vector.broadcast %cst_4 : f32 to vector<1x128xf32>
    %28 = arith.select %26, %27, %15 : vector<1x128xi1>, vector<1x128xf32>
    %c24_i32_5 = arith.constant 24 : i32
    %29 = vector.broadcast %c24_i32_5 : i32 to vector<1x128xi32>
    %30 = arith.cmpi sge, %0, %29 : vector<1x128xi32>
    %c32_i32 = arith.constant 32 : i32
    %31 = vector.broadcast %c32_i32 : i32 to vector<1x128xi32>
    %32 = arith.cmpi slt, %0, %31 : vector<1x128xi32>
    %33 = arith.andi %30, %32 : vector<1x128xi1>
    %c80_i32_6 = arith.constant 80 : i32
    %34 = vector.broadcast %c80_i32_6 : i32 to vector<1x128xi32>
    %35 = arith.cmpi sge, %0, %34 : vector<1x128xi32>
    %c88_i32 = arith.constant 88 : i32
    %36 = vector.broadcast %c88_i32 : i32 to vector<1x128xi32>
    %37 = arith.cmpi slt, %0, %36 : vector<1x128xi32>
    %38 = arith.andi %35, %37 : vector<1x128xi1>
    %39 = arith.ori %33, %38 : vector<1x128xi1>
    %cst_7 = arith.constant 12.566371 : f32
    %40 = vector.broadcast %cst_7 : f32 to vector<1x128xf32>
    %41 = arith.select %39, %40, %28 : vector<1x128xi1>, vector<1x128xf32>
    %c32_i32_8 = arith.constant 32 : i32
    %42 = vector.broadcast %c32_i32_8 : i32 to vector<1x128xi32>
    %43 = arith.cmpi sge, %0, %42 : vector<1x128xi32>
    %c40_i32 = arith.constant 40 : i32
    %44 = vector.broadcast %c40_i32 : i32 to vector<1x128xi32>
    %45 = arith.cmpi slt, %0, %44 : vector<1x128xi32>
    %46 = arith.andi %43, %45 : vector<1x128xi1>
    %c88_i32_9 = arith.constant 88 : i32
    %47 = vector.broadcast %c88_i32_9 : i32 to vector<1x128xi32>
    %48 = arith.cmpi sge, %0, %47 : vector<1x128xi32>
    %c96_i32 = arith.constant 96 : i32
    %49 = vector.broadcast %c96_i32 : i32 to vector<1x128xi32>
    %50 = arith.cmpi slt, %0, %49 : vector<1x128xi32>
    %51 = arith.andi %48, %50 : vector<1x128xi1>
    %52 = arith.ori %46, %51 : vector<1x128xi1>
    %cst_10 = arith.constant 25.1327419 : f32
    %53 = vector.broadcast %cst_10 : f32 to vector<1x128xf32>
    %54 = arith.select %52, %53, %41 : vector<1x128xi1>, vector<1x128xf32>
    %c40_i32_11 = arith.constant 40 : i32
    %55 = vector.broadcast %c40_i32_11 : i32 to vector<1x128xi32>
    %56 = arith.cmpi sge, %0, %55 : vector<1x128xi32>
    %c48_i32 = arith.constant 48 : i32
    %57 = vector.broadcast %c48_i32 : i32 to vector<1x128xi32>
    %58 = arith.cmpi slt, %0, %57 : vector<1x128xi32>
    %59 = arith.andi %56, %58 : vector<1x128xi1>
    %c96_i32_12 = arith.constant 96 : i32
    %60 = vector.broadcast %c96_i32_12 : i32 to vector<1x128xi32>
    %61 = arith.cmpi sge, %0, %60 : vector<1x128xi32>
    %c104_i32 = arith.constant 104 : i32
    %62 = vector.broadcast %c104_i32 : i32 to vector<1x128xi32>
    %63 = arith.cmpi slt, %0, %62 : vector<1x128xi32>
    %64 = arith.andi %61, %63 : vector<1x128xi1>
    %65 = arith.ori %59, %64 : vector<1x128xi1>
    %cst_13 = arith.constant 50.2654839 : f32
    %66 = vector.broadcast %cst_13 : f32 to vector<1x128xf32>
    %67 = arith.select %65, %66, %54 : vector<1x128xi1>, vector<1x128xf32>
    %c48_i32_14 = arith.constant 48 : i32
    %68 = vector.broadcast %c48_i32_14 : i32 to vector<1x128xi32>
    %69 = arith.cmpi sge, %0, %68 : vector<1x128xi32>
    %c56_i32 = arith.constant 56 : i32
    %70 = vector.broadcast %c56_i32 : i32 to vector<1x128xi32>
    %71 = arith.cmpi slt, %0, %70 : vector<1x128xi32>
    %72 = arith.andi %69, %71 : vector<1x128xi1>
    %c104_i32_15 = arith.constant 104 : i32
    %73 = vector.broadcast %c104_i32_15 : i32 to vector<1x128xi32>
    %74 = arith.cmpi sge, %0, %73 : vector<1x128xi32>
    %c112_i32 = arith.constant 112 : i32
    %75 = vector.broadcast %c112_i32 : i32 to vector<1x128xi32>
    %76 = arith.cmpi slt, %0, %75 : vector<1x128xi32>
    %77 = arith.andi %74, %76 : vector<1x128xi1>
    %78 = arith.ori %72, %77 : vector<1x128xi1>
    %cst_16 = arith.constant 100.530968 : f32
    %79 = vector.broadcast %cst_16 : f32 to vector<1x128xf32>
    %80 = arith.select %78, %79, %67 : vector<1x128xi1>, vector<1x128xf32>
    %c56_i32_17 = arith.constant 56 : i32
    %81 = vector.broadcast %c56_i32_17 : i32 to vector<1x128xi32>
    %82 = arith.cmpi sge, %0, %81 : vector<1x128xi32>
    %c64_i32_18 = arith.constant 64 : i32
    %83 = vector.broadcast %c64_i32_18 : i32 to vector<1x128xi32>
    %84 = arith.cmpi slt, %0, %83 : vector<1x128xi32>
    %85 = arith.andi %82, %84 : vector<1x128xi1>
    %c112_i32_19 = arith.constant 112 : i32
    %86 = vector.broadcast %c112_i32_19 : i32 to vector<1x128xi32>
    %87 = arith.cmpi sge, %0, %86 : vector<1x128xi32>
    %c120_i32 = arith.constant 120 : i32
    %88 = vector.broadcast %c120_i32 : i32 to vector<1x128xi32>
    %89 = arith.cmpi slt, %0, %88 : vector<1x128xi32>
    %90 = arith.andi %87, %89 : vector<1x128xi1>
    %91 = arith.ori %85, %90 : vector<1x128xi1>
    %cst_20 = arith.constant 201.061935 : f32
    %92 = vector.broadcast %cst_20 : f32 to vector<1x128xf32>
    %93 = arith.select %91, %92, %80 : vector<1x128xi1>, vector<1x128xf32>
    %94 = arith.mulf %93, %1 : vector<1x128xf32>
    %95 = math.sin %94 : vector<1x128xf32>
    %96 = math.cos %94 : vector<1x128xf32>
    %c8_i32_21 = arith.constant 8 : i32
    %97 = vector.broadcast %c8_i32_21 : i32 to vector<1x128xi32>
    %98 = arith.cmpi slt, %0, %97 : vector<1x128xi32>
    %c64_i32_22 = arith.constant 64 : i32
    %99 = vector.broadcast %c64_i32_22 : i32 to vector<1x128xi32>
    %100 = arith.cmpi slt, %0, %99 : vector<1x128xi32>
    %c120_i32_23 = arith.constant 120 : i32
    %101 = vector.broadcast %c120_i32_23 : i32 to vector<1x128xi32>
    %102 = arith.cmpi slt, %0, %101 : vector<1x128xi32>
    %cst_24 = arith.constant 0.000000e+00 : f32
    %103 = vector.broadcast %cst_24 : f32 to vector<1x128xf32>
    %104 = arith.select %102, %96, %103 : vector<1x128xi1>, vector<1x128xf32>
    %105 = arith.select %100, %95, %104 : vector<1x128xi1>, vector<1x128xf32>
    %106 = arith.select %98, %1, %105 : vector<1x128xi1>, vector<1x128xf32>
    %c0_25 = arith.constant 0 : index
    %c0_26 = arith.constant 0 : index
    %107 = vector.load %arg1[%c0_25, %c0_26] : memref<904x256xf32, #tpu.memory_space<vmem>>, vector<128x256xf32>
    %c128 = arith.constant 128 : index
    %c0_27 = arith.constant 0 : index
    %108 = vector.load %arg1[%c128, %c0_27] : memref<904x256xf32, #tpu.memory_space<vmem>>, vector<256x256xf32>
    %c384 = arith.constant 384 : index
    %c0_28 = arith.constant 0 : index
    %109 = vector.load %arg1[%c384, %c0_28] : memref<904x256xf32, #tpu.memory_space<vmem>>, vector<256x256xf32>
    %c640 = arith.constant 640 : index
    %c0_29 = arith.constant 0 : index
    %110 = vector.load %arg1[%c640, %c0_29] : memref<904x256xf32, #tpu.memory_space<vmem>>, vector<256x128xf32>
    %c896 = arith.constant 896 : index
    %c0_30 = arith.constant 0 : index
    %111 = vector.load %arg1[%c896, %c0_30] : memref<904x256xf32, #tpu.memory_space<vmem>>, vector<8x256xf32>
    %112 = vector.extract_strided_slice %111 {offsets = [0, 0], sizes = [1, 256], strides = [1, 1]} : vector<8x256xf32> to vector<1x256xf32>
    %113 = vector.extract_strided_slice %111 {offsets = [1, 0], sizes = [1, 256], strides = [1, 1]} : vector<8x256xf32> to vector<1x256xf32>
    %114 = vector.extract_strided_slice %111 {offsets = [2, 0], sizes = [1, 256], strides = [1, 1]} : vector<8x256xf32> to vector<1x256xf32>
    %115 = vector.extract_strided_slice %111 {offsets = [3, 0], sizes = [1, 128], strides = [1, 1]} : vector<8x256xf32> to vector<1x128xf32>
    %cst_31 = arith.constant dense<0.000000e+00> : vector<1x256xf32>
    %116 = tpu.matmul %106, %107, %cst_31 {dimension_numbers = #tpu.dot_dimension_numbers<[1], [0], [0], [1], [0, 0, 1, 1], [], []>} : vector<1x128xf32>, vector<128x256xf32>, vector<1x256xf32> -> vector<1x256xf32>
    %117 = arith.addf %116, %112 : vector<1x256xf32>
    %cst_32 = arith.constant 0.000000e+00 : f32
    %118 = vector.broadcast %cst_32 : f32 to vector<1x256xf32>
    %119 = arith.cmpf ogt, %117, %118 : vector<1x256xf32>
    %cst_33 = arith.constant 2.000000e-01 : f32
    %120 = vector.broadcast %cst_33 : f32 to vector<1x256xf32>
    %121 = arith.mulf %120, %117 : vector<1x256xf32>
    %122 = arith.select %119, %117, %121 : vector<1x256xi1>, vector<1x256xf32>
    %cst_34 = arith.constant dense<0.000000e+00> : vector<1x256xf32>
    %123 = tpu.matmul %122, %108, %cst_34 {dimension_numbers = #tpu.dot_dimension_numbers<[1], [0], [0], [1], [0, 0, 1, 1], [], []>} : vector<1x256xf32>, vector<256x256xf32>, vector<1x256xf32> -> vector<1x256xf32>
    %124 = arith.addf %123, %113 : vector<1x256xf32>
    %cst_35 = arith.constant 0.000000e+00 : f32
    %125 = vector.broadcast %cst_35 : f32 to vector<1x256xf32>
    %126 = arith.cmpf ogt, %124, %125 : vector<1x256xf32>
    %cst_36 = arith.constant 2.000000e-01 : f32
    %127 = vector.broadcast %cst_36 : f32 to vector<1x256xf32>
    %128 = arith.mulf %127, %124 : vector<1x256xf32>
    %129 = arith.select %126, %124, %128 : vector<1x256xi1>, vector<1x256xf32>
    %cst_37 = arith.constant dense<0.000000e+00> : vector<1x256xf32>
    %130 = tpu.matmul %129, %109, %cst_37 {dimension_numbers = #tpu.dot_dimension_numbers<[1], [0], [0], [1], [0, 0, 1, 1], [], []>} : vector<1x256xf32>, vector<256x256xf32>, vector<1x256xf32> -> vector<1x256xf32>
    %131 = arith.addf %130, %114 : vector<1x256xf32>
    %cst_38 = arith.constant 0.000000e+00 : f32
    %132 = vector.broadcast %cst_38 : f32 to vector<1x256xf32>
    %133 = arith.cmpf ogt, %131, %132 : vector<1x256xf32>
    %cst_39 = arith.constant 2.000000e-01 : f32
    %134 = vector.broadcast %cst_39 : f32 to vector<1x256xf32>
    %135 = arith.mulf %134, %131 : vector<1x256xf32>
    %136 = arith.select %133, %131, %135 : vector<1x256xi1>, vector<1x256xf32>
    %cst_40 = arith.constant dense<0.000000e+00> : vector<1x128xf32>
    %137 = tpu.matmul %136, %110, %cst_40 {dimension_numbers = #tpu.dot_dimension_numbers<[1], [0], [0], [1], [0, 0, 1, 1], [], []>} : vector<1x256xf32>, vector<256x128xf32>, vector<1x128xf32> -> vector<1x128xf32>
    %138 = arith.addf %137, %115 : vector<1x128xf32>
    %c4_i32 = arith.constant 4 : i32
    %139 = vector.broadcast %c4_i32 : i32 to vector<1x128xi32>
    %140 = arith.cmpi slt, %0, %139 : vector<1x128xi32>
    %cst_41 = arith.constant -1.000000e+30 : f32
    %141 = vector.broadcast %cst_41 : f32 to vector<1x128xf32>
    %142 = arith.select %140, %138, %141 : vector<1x128xi1>, vector<1x128xf32>
    %cst_42 = arith.constant dense<0xFF800000> : vector<1xf32>
    %143 = vector.multi_reduction <maximumf>, %142, %cst_42 [1] : vector<1x128xf32> to vector<1xf32>
    %144 = vector.shape_cast %143 : vector<1xf32> to vector<1x1xf32>
    %145 = vector.broadcast %144 : vector<1x1xf32> to vector<1x128xf32>
    %146 = arith.subf %142, %145 : vector<1x128xf32>
    %147 = math.exp %146 : vector<1x128xf32>
    %cst_43 = arith.constant dense<0.000000e+00> : vector<1xf32>
    %148 = vector.multi_reduction <add>, %147, %cst_43 [1] : vector<1x128xf32> to vector<1xf32>
    %149 = vector.shape_cast %148 : vector<1xf32> to vector<1x1xf32>
    %150 = tpu.reciprocal %149 {approx = true} : vector<1x1xf32> -> vector<1x1xf32>
    %151 = vector.broadcast %150 : vector<1x1xf32> to vector<1x128xf32>
    %152 = arith.mulf %147, %151 : vector<1x128xf32>
    %c4_i32_44 = arith.constant 4 : i32
    %153 = vector.broadcast %c4_i32_44 : i32 to vector<1x128xi32>
    %154 = arith.cmpi eq, %0, %153 : vector<1x128xi32>
    %155 = arith.select %154, %138, %152 : vector<1x128xi1>, vector<1x128xf32>
    %c0_45 = arith.constant 0 : index
    %c0_46 = arith.constant 0 : index
    %156 = vector.load %arg2[%c0_45, %c0_46] : memref<1x128xf32, #tpu.memory_space<vmem>>, vector<1x128xf32>
    tpu.vector_store %arg2[%c0_45, %c0_46], %155 {strides = array<i32>} : memref<1x128xf32, #tpu.memory_space<vmem>>, vector<1x128xf32>,
    return
  }
}

</mosaic_0001>

<llo_original>
// kernel: actor_critic_forward.1
$region0: #{actor_critic_forward.1}
  #allocation0 [shape = 'u32[]', space=smem, size = 0x4, offset = 0x4, fixed_abs, tag = 'smem constant byte address 0x4 - core index']
  #allocation1 [shape = 'u32[72,128]{1,0:T(1,128)}', space=vmem, size = 0x9000, scoped, tag = 'internal scratch']
  %s0 = inlined_call_operand.vmem [shape: f32[1,128], index: 0, kind: input, shape index: {}]
  %s1 = inlined_call_operand.hbm [shape: f32[904,256], index: 1, kind: input, shape index: {}]
  %s2 = inlined_call_operand.vmem [shape: f32[1,128], index: 2, kind: output, shape index: {}]
  %s3 = sld [smem:[#allocation0]]
  $region22: #{actor_critic_forward.1} parent=0
    _
  %s5 = ssub.s32 1, %s3
  %s6 = scalar_select 0, %s5, %s3
  $region1: #{actor_critic_forward.1} parent=0
    #allocation2 [shape = 'u8[925696]{0}', space=vmem, size = 0xe2000, scoped, tag = 'input window, operand 1, single buffered']
    #allocation3 [shape = 's32[1]{0}', space=sflag, size = 0x4, scoped, tag = 'scoped memory for actor_critic_forward.1']
    %7 = vsyncpa [#allocation3], 0
    // Predicated region
    $region2: #{actor_critic_forward.1} parent=1 // pred_check
      _
    $region3: #{actor_critic_forward.1} parent=1 // pred_check_branch
      %9 = sbr.rel (0) target = $region5
    $region4: #{actor_critic_forward.1} parent=1 // pred_region
      _
    $region5: #{actor_critic_forward.1} parent=1 // pred_fallthru
      _
    // Predicated region
    $region6: #{actor_critic_forward.1} parent=1 // pred_check
      _
    $region7: #{actor_critic_forward.1} parent=1 // pred_check_branch
      %11 = sbr.rel (0) target = $region9
    $region8: #{actor_critic_forward.1} parent=1 // pred_region
      %13 = vsyncadd [#allocation3], 0
      %s14 = sshll.u32 %s1, 4
      %s15 = int_to_ptr.hbm [resolvable:$true] %s14
      %s16 = sshll.u32 [#allocation2], 4
      %s17 = int_to_ptr.vmem [resolvable:$true] %s16
      %22 = dma.hbm_to_vmem [thread:$0]  %s15, 28928, %s17, [#allocation3], 256, 256, 16
    $region9: #{actor_critic_forward.1} parent=1 // pred_fallthru
      _
    // Predicated region
    $region10: #{actor_critic_forward.1} parent=1 // pred_check
      _
    $region11: #{actor_critic_forward.1} parent=1 // pred_check_branch
      %24 = sbr.rel (0) target = $region13
    $region12: #{actor_critic_forward.1} parent=1 // pred_region
      %26 = dma.done [#allocation3], 28928
    $region13: #{actor_critic_forward.1} parent=1 // pred_fallthru
      _
    %v27 = vlaneseq
    %v28 = vand.u32 %v27, 127
    %v29 = vld [vmem:[%s0] sm:$0x1]
    %vm30 = vcmp.ge.s32.totalorder %v28, 8
    %vm31 = vcmp.lt.s32.totalorder %v28, 16
    %vm32 = vmand %vm30, %vm31
    %vm33 = vcmp.ge.s32.totalorder %v28, 64
    %vm34 = vcmp.lt.s32.totalorder %v28, 72
    %vm35 = vmand %vm33, %vm34
    %vm36 = vmor %vm32, %vm35
    %v37 = vsel %vm36, 3.1415927, 0.0
    %vm38 = vcmp.ge.s32.totalorder %v28, 16
    %vm39 = vcmp.lt.s32.totalorder %v28, 24
    %vm40 = vmand %vm38, %vm39
    %vm41 = vcmp.ge.s32.totalorder %v28, 72
    %vm42 = vcmp.lt.s32.totalorder %v28, 80
    %vm43 = vmand %vm41, %vm42
    %vm44 = vmor %vm40, %vm43
    %v45 = vsel %vm44, 6.2831855, %v37
    %vm46 = vcmp.ge.s32.totalorder %v28, 24
    %vm47 = vcmp.lt.s32.totalorder %v28, 32
    %vm48 = vmand %vm46, %vm47
    %vm49 = vcmp.ge.s32.totalorder %v28, 80
    %vm50 = vcmp.lt.s32.totalorder %v28, 88
    %vm51 = vmand %vm49, %vm50
    %vm52 = vmor %vm48, %vm51
    %v53 = vsel %vm52, 12.566371, %v45
    %vm54 = vcmp.ge.s32.totalorder %v28, 32
    %vm55 = vcmp.lt.s32.totalorder %v28, 40
    %vm56 = vmand %vm54, %vm55
    %vm57 = vcmp.ge.s32.totalorder %v28, 88
    %vm58 = vcmp.lt.s32.totalorder %v28, 96
    %vm59 = vmand %vm57, %vm58
    %vm60 = vmor %vm56, %vm59
    %v61 = vsel %vm60, 25.132742, %v53
    %vm62 = vcmp.ge.s32.totalorder %v28, 40
    %vm63 = vcmp.lt.s32.totalorder %v28, 48
    %vm64 = vmand %vm62, %vm63
    %vm65 = vcmp.ge.s32.totalorder %v28, 96
    %vm66 = vcmp.lt.s32.totalorder %v28, 104
    %vm67 = vmand %vm65, %vm66
    %vm68 = vmor %vm64, %vm67
    %v69 = vsel %vm68, 50.265484, %v61
    %vm70 = vcmp.ge.s32.totalorder %v28, 48
    %vm71 = vcmp.lt.s32.totalorder %v28, 56
    %vm72 = vmand %vm70, %vm71
    %vm73 = vcmp.ge.s32.totalorder %v28, 104
    %vm74 = vcmp.lt.s32.totalorder %v28, 112
    %vm75 = vmand %vm73, %vm74
    %vm76 = vmor %vm72, %vm75
    %v77 = vsel %vm76, 100.53097, %v69
    %vm78 = vcmp.ge.s32.totalorder %v28, 56
    %vm79 = vcmp.lt.s32.totalorder %v28, 64
    %vm80 = vmand %vm78, %vm79
    %vm81 = vcmp.ge.s32.totalorder %v28, 112
    %vm82 = vcmp.lt.s32.totalorder %v28, 120
    %vm83 = vmand %vm81, %vm82
    %vm84 = vmor %vm80, %vm83
    %v85 = vsel %vm84, 201.06194, %v77
    %v86 = vmul.f32 %v85, %v29
    %v87 = vand.u32 2147483647, %v86
    %vm88 = vcmp.le.f32.partialorder %v87, 0.7853982
    %vm89 = vcmp.lt.s32.totalorder %v86, 0
    %v90 = vand.u32 %v86, 2139095040
    %v91 = vshrl.u32 %v90, 23
    %v92 = vsub.s32 %v91, 127
    %v93 = vand.u32 2147483647, %v86
    %v94 = vand.u32 %v93, 8388607
    %v95 = vor.u32 %v94, 8388608
    %v96 = vsub.s32 0, %v95
    %v97 = vadd.s32 %v92, 1
    %vm98 = vcmp.gt.s32.totalorder %v97, 0
    %v99 = vsel %vm98, %v97, 0
    %v100 = vshrl.u32 %v99, 5
    %v101 = vand.u32 %v99, 31
    %v102 = vsub.s32 32, %v101
    %v103 = vshrl.u32 683565275, %v102
    %v104 = vshll.u32 683565275, %v101
    %v105 = vshrl.u32 2475754826, %v102
    %v106 = vor.u32 %v104, %v105
    %v107 = vshll.u32 2475754826, %v101
    %v108 = vshrl.u32 2131351028, %v102
    %v109 = vor.u32 %v107, %v108
    %v110 = vshll.u32 2131351028, %v101
    %v111 = vshrl.u32 2102212464, %v102
    %v112 = vor.u32 %v110, %v111
    %v113 = vshll.u32 2102212464, %v101
    %v114 = vshrl.u32 920167782, %v102
    %v115 = vor.u32 %v113, %v114
    %v116 = vshll.u32 920167782, %v101
    %v117 = vshrl.u32 1326507024, %v102
    %v118 = vor.u32 %v116, %v117
    %vm119 = vcmp.lt.s32.totalorder %v100, 1
    %vm120 = vcmp.lt.s32.totalorder %v100, 2
    %vm121 = vcmp.lt.s32.totalorder %v100, 3
    %vm122 = vcmp.lt.s32.totalorder %v100, 4
    %v123 = vsel %vm119, %v103, %v106
    %v124 = vsel %vm122, %v112, 2102212464
    %v125 = vsel %vm121, %v109, %v124
    %v126 = vsel %vm120, %v123, %v125
    %v127 = vsel %vm119, %v106, %v109
    %v128 = vsel %vm122, %v115, 920167782
    %v129 = vsel %vm121, %v112, %v128
    %v130 = vsel %vm120, %v127, %v129
    %v131 = vsel %vm119, %v109, %v112
    %v132 = vsel %vm122, %v118, 1326507024
    %v133 = vsel %vm121, %v115, %v132
    %v134 = vsel %vm120, %v131, %v133
    %v135 = vshll.u32 %v95, 8
    %v136 = vand.u32 %v135, 65535
    %v137 = vshrl.u32 %v135, 16
    %v138 = vand.u32 %v134, 65535
    %v139 = vshrl.u32 %v134, 16
    %v140 = vmul.u32 %v136, %v138
    %v141 = vmul.u32 %v136, %v139
    %v142 = vmul.u32 %v137, %v138
    %v143 = vmul.u32 %v137, %v139
    %v144 = vshll.u32 %v141, 16
    %v145 = vshrl.u32 %v141, 16
    %v146 = vshll.u32 %v142, 16
    %v147 = vshrl.u32 %v142, 16
    %vm148 = vc.u32 %v140, %v144
    %v149 = vsel %vm148, 1, 0
    %v150 = vadd.s32 %v140, %v144
    %v151 = vadd.s32 %v143, %v149
    %vm152 = vc.u32 %v150, %v146
    %v153 = vsel %vm152, 1, 0
    %v154 = vadd.s32 %v150, %v146
    %v155 = vadd.s32 %v151, %v153
    %v156 = vadd.s32 %v155, %v145
    %v157 = vadd.s32 %v156, %v147
    %v158 = vand.u32 %v135, 65535
    %v159 = vshrl.u32 %v135, 16
    %v160 = vand.u32 %v130, 65535
    %v161 = vshrl.u32 %v130, 16
    %v162 = vmul.u32 %v158, %v160
    %v163 = vmul.u32 %v158, %v161
    %v164 = vmul.u32 %v159, %v160
    %v165 = vmul.u32 %v159, %v161
    %v166 = vshll.u32 %v163, 16
    %v167 = vshrl.u32 %v163, 16
    %v168 = vshll.u32 %v164, 16
    %v169 = vshrl.u32 %v164, 16
    %vm170 = vc.u32 %v162, %v166
    %v171 = vsel %vm170, 1, 0
    %v172 = vadd.s32 %v162, %v166
    %v173 = vadd.s32 %v165, %v171
    %vm174 = vc.u32 %v172, %v168
    %v175 = vsel %vm174, 1, 0
    %v176 = vadd.s32 %v172, %v168
    %v177 = vadd.s32 %v173, %v175
    %v178 = vadd.s32 %v177, %v167
    %v179 = vadd.s32 %v178, %v169
    %v180 = vmul.u32 %v135, %v126
    %v181 = vadd.s32 %v157, %v176
    %vm182 = vc.u32 %v157, %v176
    %v183 = vadd.s32 %v179, 1
    %v184 = vsel %vm182, %v183, %v179
    %v185 = vadd.s32 %v180, %v184
    %v186 = vadd.s32 %v185, 536870912
    %v187 = vshrl.u32 %v186, 30
    %v188 = vshll.u32 %v187, 30
    %v189 = vsub.s32 %v185, %v188
    %vm190 = vcmp.lt.s32.totalorder %v189, 0
    %v191 = vsub.s32 0, %v189
    %v192 = vsel %vm190, %v191, %v189
    %v193 = vclz %v192
    %v194 = vsub.s32 %v193, 2
    %vm195 = vcmp.gt.s32.totalorder 0, %v194
    %v196 = vsel %vm195, 0, %v194
    %v197 = vsub.s32 32, %v196
    %v198 = vshll.u32 %v189, %v196
    %v199 = vshrl.u32 %v181, %v197
    %v200 = vor.u32 %v198, %v199
    %v201 = vsub.s32 4294967266, %v196
    %v202 = vadd.s32 %v201, 127
    %v203 = vshll.u32 %v202, 23
    %v204 = vor.u32 4788187, %v203
    %v205 = vand.u32 2147483647, %v204
    %v207 = vcvt.s32.f32 %v200
    %v208 = vmul.f32 %v207, %v205
    %v209 = vxor.u32 %v208, 2147483648
    %v210 = vsel %vm89, %v209, %v208
    %v211 = vsub.s32 4, %v187
    %v212 = vsel %vm89, %v211, %v187
    %v213 = vsel %vm88, %v86, %v210
    %v214 = vsel %vm88, 0, %v212
    %v215 = vmul.f32 %v213, %v213
    %v216 = vmul.f32 %v215, -0.001358992
    %v217 = vadd.f32 %v216, 0.041655596
    %v218 = vmul.f32 %v215, %v217
    %v219 = vadd.f32 %v218, -0.4999988
    %v220 = vmul.f32 %v215, %v219
    %v221 = vadd.f32 1.0, %v220
    %v222 = vmul.f32 %v213, %v213
    %v223 = vmul.f32 %v222, -0.00019511016
    %v224 = vadd.f32 %v223, 0.008332121
    %v225 = vmul.f32 %v222, %v224
    %v226 = vadd.f32 %v225, -0.16666654
    %v227 = vmul.f32 %v222, %v226
    %v228 = vadd.f32 %v227, 1.0
    %v229 = vmul.f32 %v228, %v213
    %vm230 = vweird.f32 %v86
    %v231 = vadd.s32 %v214, 3
    %v232 = vand.u32 %v231, 3
    %vm233 = vcmp.lt.s32.totalorder %v232, 2
    %vm234 = vcmp.eq.s32.totalorder %v232, 0
    %v235 = vxor.u32 %v229, 2147483648
    %v236 = vsel %vm234, %v221, %v235
    %vm237 = vcmp.eq.s32.totalorder %v232, 2
    %v238 = vxor.u32 %v221, 2147483648
    %v239 = vsel %vm237, %v238, %v229
    %v240 = vsel %vm233, %v236, %v239
    %v241 = vsel %vm230, nan, %v240
    %v242 = vand.u32 2147483647, %v86
    %vm243 = vcmp.le.f32.partialorder %v242, 0.7853982
    %vm244 = vcmp.lt.s32.totalorder %v86, 0
    %v245 = vand.u32 %v86, 2139095040
    %v246 = vshrl.u32 %v245, 23
    %v247 = vsub.s32 %v246, 127
    %v248 = vand.u32 2147483647, %v86
    %v249 = vand.u32 %v248, 8388607
    %v250 = vor.u32 %v249, 8388608
    %v251 = vsub.s32 0, %v250
    %v252 = vadd.s32 %v247, 1
    %vm253 = vcmp.gt.s32.totalorder %v252, 0
    %v254 = vsel %vm253, %v252, 0
    %v255 = vshrl.u32 %v254, 5
    %v256 = vand.u32 %v254, 31
    %v257 = vsub.s32 32, %v256
    %v258 = vshrl.u32 683565275, %v257
    %v259 = vshll.u32 683565275, %v256
    %v260 = vshrl.u32 2475754826, %v257
    %v261 = vor.u32 %v259, %v260
    %v262 = vshll.u32 2475754826, %v256
    %v263 = vshrl.u32 2131351028, %v257
    %v264 = vor.u32 %v262, %v263
    %v265 = vshll.u32 2131351028, %v256
    %v266 = vshrl.u32 2102212464, %v257
    %v267 = vor.u32 %v265, %v266
    %v268 = vshll.u32 2102212464, %v256
    %v269 = vshrl.u32 920167782, %v257
    %v270 = vor.u32 %v268, %v269
    %v271 = vshll.u32 920167782, %v256
    %v272 = vshrl.u32 1326507024, %v257
    %v273 = vor.u32 %v271, %v272
    %vm274 = vcmp.lt.s32.totalorder %v255, 1
    %vm275 = vcmp.lt.s32.totalorder %v255, 2
    %vm276 = vcmp.lt.s32.totalorder %v255, 3
    %vm277 = vcmp.lt.s32.totalorder %v255, 4
    %v278 = vsel %vm274, %v258, %v261
    %v279 = vsel %vm277, %v267, 2102212464
    %v280 = vsel %vm276, %v264, %v279
    %v281 = vsel %vm275, %v278, %v280
    %v282 = vsel %vm274, %v261, %v264
    %v283 = vsel %vm277, %v270, 920167782
    %v284 = vsel %vm276, %v267, %v283
    %v285 = vsel %vm275, %v282, %v284
    %v286 = vsel %vm274, %v264, %v267
    %v287 = vsel %vm277, %v273, 1326507024
    %v288 = vsel %vm276, %v270, %v287
    %v289 = vsel %vm275, %v286, %v288
    %v290 = vshll.u32 %v250, 8
    %v291 = vand.u32 %v290, 65535
    %v292 = vshrl.u32 %v290, 16
    %v293 = vand.u32 %v289, 65535
    %v294 = vshrl.u32 %v289, 16
    %v295 = vmul.u32 %v291, %v293
    %v296 = vmul.u32 %v291, %v294
    %v297 = vmul.u32 %v292, %v293
    %v298 = vmul.u32 %v292, %v294
    %v299 = vshll.u32 %v296, 16
    %v300 = vshrl.u32 %v296, 16
    %v301 = vshll.u32 %v297, 16
    %v302 = vshrl.u32 %v297, 16
    %vm303 = vc.u32 %v295, %v299
    %v304 = vsel %vm303, 1, 0
    %v305 = vadd.s32 %v295, %v299
    %v306 = vadd.s32 %v298, %v304
    %vm307 = vc.u32 %v305, %v301
    %v308 = vsel %vm307, 1, 0
    %v309 = vadd.s32 %v305, %v301
    %v310 = vadd.s32 %v306, %v308
    %v311 = vadd.s32 %v310, %v300
    %v312 = vadd.s32 %v311, %v302
    %v313 = vand.u32 %v290, 65535
    %v314 = vshrl.u32 %v290, 16
    %v315 = vand.u32 %v285, 65535
    %v316 = vshrl.u32 %v285, 16
    %v317 = vmul.u32 %v313, %v315
    %v318 = vmul.u32 %v313, %v316
    %v319 = vmul.u32 %v314, %v315
    %v320 = vmul.u32 %v314, %v316
    %v321 = vshll.u32 %v318, 16
    %v322 = vshrl.u32 %v318, 16
    %v323 = vshll.u32 %v319, 16
    %v324 = vshrl.u32 %v319, 16
    %vm325 = vc.u32 %v317, %v321
    %v326 = vsel %vm325, 1, 0
    %v327 = vadd.s32 %v317, %v321
    %v328 = vadd.s32 %v320, %v326
    %vm329 = vc.u32 %v327, %v323
    %v330 = vsel %vm329, 1, 0
    %v331 = vadd.s32 %v327, %v323
    %v332 = vadd.s32 %v328, %v330
    %v333 = vadd.s32 %v332, %v322
    %v334 = vadd.s32 %v333, %v324
    %v335 = vmul.u32 %v290, %v281
    %v336 = vadd.s32 %v312, %v331
    %vm337 = vc.u32 %v312, %v331
    %v338 = vadd.s32 %v334, 1
    %v339 = vsel %vm337, %v338, %v334
    %v340 = vadd.s32 %v335, %v339
    %v341 = vadd.s32 %v340, 536870912
    %v342 = vshrl.u32 %v341, 30
    %v343 = vshll.u32 %v342, 30
    %v344 = vsub.s32 %v340, %v343
    %vm345 = vcmp.lt.s32.totalorder %v344, 0
    %v346 = vsub.s32 0, %v344
    %v347 = vsel %vm345, %v346, %v344
    %v348 = vclz %v347
    %v349 = vsub.s32 %v348, 2
    %vm350 = vcmp.gt.s32.totalorder 0, %v349
    %v351 = vsel %vm350, 0, %v349
    %v352 = vsub.s32 32, %v351
    %v353 = vshll.u32 %v344, %v351
    %v354 = vshrl.u32 %v336, %v352
    %v355 = vor.u32 %v353, %v354
    %v356 = vsub.s32 4294967266, %v351
    %v357 = vadd.s32 %v356, 127
    %v358 = vshll.u32 %v357, 23
    %v359 = vor.u32 4788187, %v358
    %v360 = vand.u32 2147483647, %v359
    %v362 = vcvt.s32.f32 %v355
    %v363 = vmul.f32 %v362, %v360
    %v364 = vxor.u32 %v363, 2147483648
    %v365 = vsel %vm244, %v364, %v363
    %v366 = vsub.s32 4, %v342
    %v367 = vsel %vm244, %v366, %v342
    %v368 = vsel %vm243, %v86, %v365
    %v369 = vsel %vm243, 0, %v367
    %v370 = vmul.f32 %v368, %v368
    %v371 = vmul.f32 %v370, -0.001358992
    %v372 = vadd.f32 %v371, 0.041655596
    %v373 = vmul.f32 %v370, %v372
    %v374 = vadd.f32 %v373, -0.4999988
    %v375 = vmul.f32 %v370, %v374
    %v376 = vadd.f32 1.0, %v375
    %v377 = vmul.f32 %v368, %v368
    %v378 = vmul.f32 %v377, -0.00019511016
    %v379 = vadd.f32 %v378, 0.008332121
    %v380 = vmul.f32 %v377, %v379
    %v381 = vadd.f32 %v380, -0.16666654
    %v382 = vmul.f32 %v377, %v381
    %v383 = vadd.f32 %v382, 1.0
    %v384 = vmul.f32 %v383, %v368
    %vm385 = vweird.f32 %v86
    %v386 = vand.u32 %v369, 3
    %vm387 = vcmp.lt.s32.totalorder %v386, 2
    %vm388 = vcmp.eq.s32.totalorder %v386, 0
    %v389 = vxor.u32 %v384, 2147483648
    %v390 = vsel %vm388, %v376, %v389
    %vm391 = vcmp.eq.s32.totalorder %v386, 2
    %v392 = vxor.u32 %v376, 2147483648
    %v393 = vsel %vm391, %v392, %v384
    %v394 = vsel %vm387, %v390, %v393
    %v395 = vsel %vm385, nan, %v394
    %vm396 = vcmp.lt.s32.totalorder %v28, 8
    %v397 = vsel %vm82, %v395, 0.0
    %v398 = vsel %vm79, %v241, %v397
    %v399 = vsel %vm396, %v29, %v398
    %v400 = vld [vmem:[#allocation2] sm:$0xff]
    %v401 = vld [vmem:[#allocation2 + $0x8] sm:$0xff]
    %v402 = vld [vmem:[#allocation2 + $0x10] sm:$0xff]
    %v403 = vld [vmem:[#allocation2 + $0x18] sm:$0xff]
    %v404 = vld [vmem:[#allocation2 + $0x20] sm:$0xff]
    %v405 = vld [vmem:[#allocation2 + $0x28] sm:$0xff]
    %v406 = vld [vmem:[#allocation2 + $0x30] sm:$0xff]
    %v407 = vld [vmem:[#allocation2 + $0x38] sm:$0xff]
    %v408 = vld [vmem:[#allocation2 + $0x40] sm:$0xff]
    %v409 = vld [vmem:[#allocation2 + $0x48] sm:$0xff]
    %v410 = vld [vmem:[#allocation2 + $0x50] sm:$0xff]
    %v411 = vld [vmem:[#allocation2 + $0x58] sm:$0xff]
    %v412 = vld [vmem:[#allocation2 + $0x60] sm:$0xff]
    %v413 = vld [vmem:[#allocation2 + $0x68] sm:$0xff]
    %v414 = vld [vmem:[#allocation2 + $0x70] sm:$0xff]
    %v415 = vld [vmem:[#allocation2 + $0x78] sm:$0xff]
    %v416 = vld [vmem:[#allocation2 + $0x80] sm:$0xff]
    %v417 = vld [vmem:[#allocation2 + $0x88] sm:$0xff]
    %v418 = vld [vmem:[#allocation2 + $0x90] sm:$0xff]
    %v419 = vld [vmem:[#allocation2 + $0x98] sm:$0xff]
    %v420 = vld [vmem:[#allocation2 + $0xa0] sm:$0xff]
    %v421 = vld [vmem:[#allocation2 + $0xa8] sm:$0xff]
    %v422 = vld [vmem:[#allocation2 + $0xb0] sm:$0xff]
    %v423 = vld [vmem:[#allocation2 + $0xb8] sm:$0xff]
    %v424 = vld [vmem:[#allocation2 + $0xc0] sm:$0xff]
    %v425 = vld [vmem:[#allocation2 + $0xc8] sm:$0xff]
    %v426 = vld [vmem:[#allocation2 + $0xd0] sm:$0xff]
    %v427 = vld [vmem:[#allocation2 + $0xd8] sm:$0xff]
    %v428 = vld [vmem:[#allocation2 + $0xe0] sm:$0xff]
    %v429 = vld [vmem:[#allocation2 + $0xe8] sm:$0xff]
    %v430 = vld [vmem:[#allocation2 + $0xf0] sm:$0xff]
    %v431 = vld [vmem:[#allocation2 + $0xf8] sm:$0xff]
    %v432 = vld [vmem:[#allocation2 + $0x100] sm:$0xff]
    %v433 = vld [vmem:[#allocation2 + $0x108] sm:$0xff]
    %v434 = vld [vmem:[#allocation2 + $0x110] sm:$0xff]
    %v435 = vld [vmem:[#allocation2 + $0x118] sm:$0xff]
    %v436 = vld [vmem:[#allocation2 + $0x120] sm:$0xff]
    %v437 = vld [vmem:[#allocation2 + $0x128] sm:$0xff]
    %v438 = vld [vmem:[#allocation2 + $0x130] sm:$0xff]
    %v439 = vld [vmem:[#allocation2 + $0x138] sm:$0xff]
    %v440 = vld [vmem:[#allocation2 + $0x140] sm:$0xff]
    %v441 = vld [vmem:[#allocation2 + $0x148] sm:$0xff]
    %v442 = vld [vmem:[#allocation2 + $0x150] sm:$0xff]
    %v443 = vld [vmem:[#allocation2 + $0x158] sm:$0xff]
    %v444 = vld [vmem:[#allocation2 + $0x160] sm:$0xff]
    %v445 = vld [vmem:[#allocation2 + $0x168] sm:$0xff]
    %v446 = vld [vmem:[#allocation2 + $0x170] sm:$0xff]
    %v447 = vld [vmem:[#allocation2 + $0x178] sm:$0xff]
    %v448 = vld [vmem:[#allocation2 + $0x180] sm:$0xff]
    %v449 = vld [vmem:[#allocation2 + $0x188] sm:$0xff]
    %v450 = vld [vmem:[#allocation2 + $0x190] sm:$0xff]
    %v451 = vld [vmem:[#allocation2 + $0x198] sm:$0xff]
    %v452 = vld [vmem:[#allocation2 + $0x1a0] sm:$0xff]
    %v453 = vld [vmem:[#allocation2 + $0x1a8] sm:$0xff]
    %v454 = vld [vmem:[#allocation2 + $0x1b0] sm:$0xff]
    %v455 = vld [vmem:[#allocation2 + $0x1b8] sm:$0xff]
    %v456 = vld [vmem:[#allocation2 + $0x1c0] sm:$0xff]
    %v457 = vld [vmem:[#allocation2 + $0x1c8] sm:$0xff]
    %v458 = vld [vmem:[#allocation2 + $0x1d0] sm:$0xff]
    %v459 = vld [vmem:[#allocation2 + $0x1d8] sm:$0xff]
    %v460 = vld [vmem:[#allocation2 + $0x1e0] sm:$0xff]
    %v461 = vld [vmem:[#allocation2 + $0x1e8] sm:$0xff]
    %v462 = vld [vmem:[#allocation2 + $0x1f0] sm:$0xff]
    %v463 = vld [vmem:[#allocation2 + $0x1f8] sm:$0xff]
    %v464 = vld [vmem:[#allocation2 + $0x200] sm:$0xff]
    %v465 = vld [vmem:[#allocation2 + $0x208] sm:$0xff]
    %v466 = vld [vmem:[#allocation2 + $0x210] sm:$0xff]
    %v467 = vld [vmem:[#allocation2 + $0x218] sm:$0xff]
    %v468 = vld [vmem:[#allocation2 + $0x220] sm:$0xff]
    %v469 = vld [vmem:[#allocation2 + $0x228] sm:$0xff]
    %v470 = vld [vmem:[#allocation2 + $0x230] sm:$0xff]
    %v471 = vld [vmem:[#allocation2 + $0x238] sm:$0xff]
    %v472 = vld [vmem:[#allocation2 + $0x240] sm:$0xff]
    %v473 = vld [vmem:[#allocation2 + $0x248] sm:$0xff]
    %v474 = vld [vmem:[#allocation2 + $0x250] sm:$0xff]
    %v475 = vld [vmem:[#allocation2 + $0x258] sm:$0xff]
    %v476 = vld [vmem:[#allocation2 + $0x260] sm:$0xff]
    %v477 = vld [vmem:[#allocation2 + $0x268] sm:$0xff]
    %v478 = vld [vmem:[#allocation2 + $0x270] sm:$0xff]
    %v479 = vld [vmem:[#allocation2 + $0x278] sm:$0xff]
    %v480 = vld [vmem:[#allocation2 + $0x280] sm:$0xff]
    %v481 = vld [vmem:[#allocation2 + $0x288] sm:$0xff]
    %v482 = vld [vmem:[#allocation2 + $0x290] sm:$0xff]
    %v483 = vld [vmem:[#allocation2 + $0x298] sm:$0xff]
    %v484 = vld [vmem:[#allocation2 + $0x2a0] sm:$0xff]
    %v485 = vld [vmem:[#allocation2 + $0x2a8] sm:$0xff]
    %v486 = vld [vmem:[#allocation2 + $0x2b0] sm:$0xff]
    %v487 = vld [vmem:[#allocation2 + $0x2b8] sm:$0xff]
    %v488 = vld [vmem:[#allocation2 + $0x2c0] sm:$0xff]
    %v489 = vld [vmem:[#allocation2 + $0x2c8] sm:$0xff]
    %v490 = vld [vmem:[#allocation2 + $0x2d0] sm:$0xff]
    %v491 = vld [vmem:[#allocation2 + $0x2d8] sm:$0xff]
    %v492 = vld [vmem:[#allocation2 + $0x2e0] sm:$0xff]
    %v493 = vld [vmem:[#allocation2 + $0x2e8] sm:$0xff]
    %v494 = vld [vmem:[#allocation2 + $0x2f0] sm:$0xff]
    %v495 = vld [vmem:[#allocation2 + $0x2f8] sm:$0xff]
    %v496 = vld [vmem:[#allocation2 + $0x300] sm:$0xff]
    %v497 = vld [vmem:[#allocation2 + $0x308] sm:$0xff]
    %v498 = vld [vmem:[#allocation2 + $0x310] sm:$0xff]
    %v499 = vld [vmem:[#allocation2 + $0x318] sm:$0xff]
    %v500 = vld [vmem:[#allocation2 + $0x320] sm:$0xff]
    %v501 = vld [vmem:[#allocation2 + $0x328] sm:$0xff]
    %v502 = vld [vmem:[#allocation2 + $0x330] sm:$0xff]
    %v503 = vld [vmem:[#allocation2 + $0x338] sm:$0xff]
    %v504 = vld [vmem:[#allocation2 + $0x340] sm:$0xff]
    %v505 = vld [vmem:[#allocation2 + $0x348] sm:$0xff]
    %v506 = vld [vmem:[#allocation2 + $0x350] sm:$0xff]
    %v507 = vld [vmem:[#allocation2 + $0x358] sm:$0xff]
    %v508 = vld [vmem:[#allocation2 + $0x360] sm:$0xff]
    %v509 = vld [vmem:[#allocation2 + $0x368] sm:$0xff]
    %v510 = vld [vmem:[#allocation2 + $0x370] sm:$0xff]
    %v511 = vld [vmem:[#allocation2 + $0x378] sm:$0xff]
    %v512 = vld [vmem:[#allocation2 + $0x380] sm:$0xff]
    %v513 = vld [vmem:[#allocation2 + $0x388] sm:$0xff]
    %v514 = vld [vmem:[#allocation2 + $0x390] sm:$0xff]
    %v515 = vld [vmem:[#allocation2 + $0x398] sm:$0xff]
    %v516 = vld [vmem:[#allocation2 + $0x3a0] sm:$0xff]
    %v517 = vld [vmem:[#allocation2 + $0x3a8] sm:$0xff]
    %v518 = vld [vmem:[#allocation2 + $0x3b0] sm:$0xff]
    %v519 = vld [vmem:[#allocation2 + $0x3b8] sm:$0xff]
    %v520 = vld [vmem:[#allocation2 + $0x3c0] sm:$0xff]
    %v521 = vld [vmem:[#allocation2 + $0x3c8] sm:$0xff]
    %v522 = vld [vmem:[#allocation2 + $0x3d0] sm:$0xff]
    %v523 = vld [vmem:[#allocation2 + $0x3d8] sm:$0xff]
    %v524 = vld [vmem:[#allocation2 + $0x3e0] sm:$0xff]
    %v525 = vld [vmem:[#allocation2 + $0x3e8] sm:$0xff]
    %v526 = vld [vmem:[#allocation2 + $0x3f0] sm:$0xff]
    %v527 = vld [vmem:[#allocation2 + $0x3f8] sm:$0xff]
    %v528 = vld [vmem:[#allocation2 + $0x400] sm:$0xff]
    %v529 = vld [vmem:[#allocation2 + $0x408] sm:$0xff]
    %v530 = vld [vmem:[#allocation2 + $0x410] sm:$0xff]
    %v531 = vld [vmem:[#allocation2 + $0x418] sm:$0xff]
    %v532 = vld [vmem:[#allocation2 + $0x420] sm:$0xff]
    %v533 = vld [vmem:[#allocation2 + $0x428] sm:$0xff]
    %v534 = vld [vmem:[#allocation2 + $0x430] sm:$0xff]
    %v535 = vld [vmem:[#allocation2 + $0x438] sm:$0xff]
    %v536 = vld [vmem:[#allocation2 + $0x440] sm:$0xff]
    %v537 = vld [vmem:[#allocation2 + $0x448] sm:$0xff]
    %v538 = vld [vmem:[#allocation2 + $0x450] sm:$0xff]
    %v539 = vld [vmem:[#allocation2 + $0x458] sm:$0xff]
    %v540 = vld [vmem:[#allocation2 + $0x460] sm:$0xff]
    %v541 = vld [vmem:[#allocation2 + $0x468] sm:$0xff]
    %v542 = vld [vmem:[#allocation2 + $0x470] sm:$0xff]
    %v543 = vld [vmem:[#allocation2 + $0x478] sm:$0xff]
    %v544 = vld [vmem:[#allocation2 + $0x480] sm:$0xff]
    %v545 = vld [vmem:[#allocation2 + $0x488] sm:$0xff]
    %v546 = vld [vmem:[#allocation2 + $0x490] sm:$0xff]
    %v547 = vld [vmem:[#allocation2 + $0x498] sm:$0xff]
    %v548 = vld [vmem:[#allocation2 + $0x4a0] sm:$0xff]
    %v549 = vld [vmem:[#allocation2 + $0x4a8] sm:$0xff]
    %v550 = vld [vmem:[#allocation2 + $0x4b0] sm:$0xff]
    %v551 = vld [vmem:[#allocation2 + $0x4b8] sm:$0xff]
    %v552 = vld [vmem:[#allocation2 + $0x4c0] sm:$0xff]
    %v553 = vld [vmem:[#allocation2 + $0x4c8] sm:$0xff]
    %v554 = vld [vmem:[#allocation2 + $0x4d0] sm:$0xff]
    %v555 = vld [vmem:[#allocation2 + $0x4d8] sm:$0xff]
    %v556 = vld [vmem:[#allocation2 + $0x4e0] sm:$0xff]
    %v557 = vld [vmem:[#allocation2 + $0x4e8] sm:$0xff]
    %v558 = vld [vmem:[#allocation2 + $0x4f0] sm:$0xff]
    %v559 = vld [vmem:[#allocation2 + $0x4f8] sm:$0xff]
    %v560 = vld [vmem:[#allocation2 + $0x500] sm:$0xff]
    %v561 = vld [vmem:[#allocation2 + $0x510] sm:$0xff]
    %v562 = vld [vmem:[#allocation2 + $0x520] sm:$0xff]
    %v563 = vld [vmem:[#allocation2 + $0x530] sm:$0xff]
    %v564 = vld [vmem:[#allocation2 + $0x540] sm:$0xff]
    %v565 = vld [vmem:[#allocation2 + $0x550] sm:$0xff]
    %v566 = vld [vmem:[#allocation2 + $0x560] sm:$0xff]
    %v567 = vld [vmem:[#allocation2 + $0x570] sm:$0xff]
    %v568 = vld [vmem:[#allocation2 + $0x580] sm:$0xff]
    %v569 = vld [vmem:[#allocation2 + $0x590] sm:$0xff]
    %v570 = vld [vmem:[#allocation2 + $0x5a0] sm:$0xff]
    %v571 = vld [vmem:[#allocation2 + $0x5b0] sm:$0xff]
    %v572 = vld [vmem:[#allocation2 + $0x5c0] sm:$0xff]
    %v573 = vld [vmem:[#allocation2 + $0x5d0] sm:$0xff]
    %v574 = vld [vmem:[#allocation2 + $0x5e0] sm:$0xff]
    %v575 = vld [vmem:[#allocation2 + $0x5f0] sm:$0xff]
    %v576 = vld [vmem:[#allocation2 + $0x600] sm:$0xff]
    %v577 = vld [vmem:[#allocation2 + $0x610] sm:$0xff]
    %v578 = vld [vmem:[#allocation2 + $0x620] sm:$0xff]
    %v579 = vld [vmem:[#allocation2 + $0x630] sm:$0xff]
    %v580 = vld [vmem:[#allocation2 + $0x640] sm:$0xff]
    %v581 = vld [vmem:[#allocation2 + $0x650] sm:$0xff]
    %v582 = vld [vmem:[#allocation2 + $0x660] sm:$0xff]
    %v583 = vld [vmem:[#allocation2 + $0x670] sm:$0xff]
    %v584 = vld [vmem:[#allocation2 + $0x680] sm:$0xff]
    %v585 = vld [vmem:[#allocation2 + $0x690] sm:$0xff]
    %v586 = vld [vmem:[#allocation2 + $0x6a0] sm:$0xff]
    %v587 = vld [vmem:[#allocation2 + $0x6b0] sm:$0xff]
    %v588 = vld [vmem:[#allocation2 + $0x6c0] sm:$0xff]
    %v589 = vld [vmem:[#allocation2 + $0x6d0] sm:$0xff]
    %v590 = vld [vmem:[#allocation2 + $0x6e0] sm:$0xff]
    %v591 = vld [vmem:[#allocation2 + $0x6f0] sm:$0xff]
    %v592 = vld [vmem:[#allocation2 + $0x700] sm:$0xff]
    %v593 = vld [vmem:[#allocation2 + $0x708] sm:$0xff]
    %594 = vmatpush.msra.mxu0 %v430
    %595 = vmatpush.msra.mxu0 %v428
    %596 = vmatpush.msra.mxu0 %v426
    %597 = vmatpush.msra.mxu0 %v424
    %598 = vmatpush.msra.mxu0 %v422
    %599 = vmatpush.msra.mxu0 %v420
    %600 = vmatpush.msra.mxu0 %v418
    %601 = vmatpush.msra.mxu0 %v416
    %602 = vmatpush.msra.mxu0 %v414
    %603 = vmatpush.msra.mxu0 %v412
    %604 = vmatpush.msra.mxu0 %v410
    %605 = vmatpush.msra.mxu0 %v408
    %606 = vmatpush.msra.mxu0 %v406
    %607 = vmatpush.msra.mxu0 %v404
    %608 = vmatpush.msra.mxu0 %v402
    %609 = vmatpush.msra.mxu0 %v400
    %610 = vmatmul.f32.gmra.mxu0 %v399
    %v611 = vpop.f32.mrf.mxu0
    %v612 = vadd.f32 %v592, %v611
    %613 = vdwg.mxu0
    %614 = vmatpush.msra.mxu0 %v431
    %615 = vmatpush.msra.mxu0 %v429
    %616 = vmatpush.msra.mxu0 %v427
    %617 = vmatpush.msra.mxu0 %v425
    %618 = vmatpush.msra.mxu0 %v423
    %619 = vmatpush.msra.mxu0 %v421
    %620 = vmatpush.msra.mxu0 %v419
    %621 = vmatpush.msra.mxu0 %v417
    %622 = vmatpush.msra.mxu0 %v415
    %623 = vmatpush.msra.mxu0 %v413
    %624 = vmatpush.msra.mxu0 %v411
    %625 = vmatpush.msra.mxu0 %v409
    %626 = vmatpush.msra.mxu0 %v407
    %627 = vmatpush.msra.mxu0 %v405
    %628 = vmatpush.msra.mxu0 %v403
    %629 = vmatpush.msra.mxu0 %v401
    %630 = vmatmul.f32.gmra.mxu0 %v399
    %v631 = vpop.f32.mrf.mxu0
    %v632 = vadd.f32 %v593, %v631
    %633 = vdwg.mxu0
    %vm634 = vcmp.gt.f32.partialorder %v612, 0.0
    %vm635 = vcmp.gt.f32.partialorder %v632, 0.0
    %v636 = vmul.f32 %v612, 0.2
    %v637 = vmul.f32 %v632, 0.2
    %v638 = vsel %vm634, %v612, %v636
    %v639 = vsel %vm635, %v632, %v637
    %v642 = vrot.slane %v592, 1
    %v643 = vrot.slane %v593, 1
    %646 = vmatpush.msra.mxu0 %v462
    %647 = vmatpush.msra.mxu0 %v460
    %648 = vmatpush.msra.mxu0 %v458
    %649 = vmatpush.msra.mxu0 %v456
    %650 = vmatpush.msra.mxu0 %v454
    %651 = vmatpush.msra.mxu0 %v452
    %652 = vmatpush.msra.mxu0 %v450
    %653 = vmatpush.msra.mxu0 %v448
    %654 = vmatpush.msra.mxu0 %v446
    %655 = vmatpush.msra.mxu0 %v444
    %656 = vmatpush.msra.mxu0 %v442
    %657 = vmatpush.msra.mxu0 %v440
    %658 = vmatpush.msra.mxu0 %v438
    %659 = vmatpush.msra.mxu0 %v436
    %660 = vmatpush.msra.mxu0 %v434
    %661 = vmatpush.msra.mxu0 %v432
    %662 = vmatmul.f32.gmra.mxu0 %v638
    %v663 = vpop.f32.mrf.mxu0
    %v664 = vadd.f32 %v642, %v663
    %665 = vdwg.mxu0
    %666 = vmatpush.msra.mxu0 %v494
    %667 = vmatpush.msra.mxu0 %v492
    %668 = vmatpush.msra.mxu0 %v490
    %669 = vmatpush.msra.mxu0 %v488
    %670 = vmatpush.msra.mxu0 %v486
    %671 = vmatpush.msra.mxu0 %v484
    %672 = vmatpush.msra.mxu0 %v482
    %673 = vmatpush.msra.mxu0 %v480
    %674 = vmatpush.msra.mxu0 %v478
    %675 = vmatpush.msra.mxu0 %v476
    %676 = vmatpush.msra.mxu0 %v474
    %677 = vmatpush.msra.mxu0 %v472
    %678 = vmatpush.msra.mxu0 %v470
    %679 = vmatpush.msra.mxu0 %v468
    %680 = vmatpush.msra.mxu0 %v466
    %681 = vmatpush.msra.mxu0 %v464
    %682 = vmatmul.f32.gmra.mxu0 %v639
    %v683 = vpop.f32.mrf.mxu0
    %v684 = vadd.f32 %v664, %v683
    %685 = vdwg.mxu0
    %686 = vmatpush.msra.mxu0 %v463
    %687 = vmatpush.msra.mxu0 %v461
    %688 = vmatpush.msra.mxu0 %v459
    %689 = vmatpush.msra.mxu0 %v457
    %690 = vmatpush.msra.mxu0 %v455
    %691 = vmatpush.msra.mxu0 %v453
    %692 = vmatpush.msra.mxu0 %v451
    %693 = vmatpush.msra.mxu0 %v449
    %694 = vmatpush.msra.mxu0 %v447
    %695 = vmatpush.msra.mxu0 %v445
    %696 = vmatpush.msra.mxu0 %v443
    %697 = vmatpush.msra.mxu0 %v441
    %698 = vmatpush.msra.mxu0 %v439
    %699 = vmatpush.msra.mxu0 %v437
    %700 = vmatpush.msra.mxu0 %v435
    %701 = vmatpush.msra.mxu0 %v433
    %702 = vmatmul.f32.gmra.mxu0 %v638
    %v703 = vpop.f32.mrf.mxu0
    %v704 = vadd.f32 %v643, %v703
    %705 = vdwg.mxu0
    %706 = vmatpush.msra.mxu0 %v495
    %707 = vmatpush.msra.mxu0 %v493
    %708 = vmatpush.msra.mxu0 %v491
    %709 = vmatpush.msra.mxu0 %v489
    %710 = vmatpush.msra.mxu0 %v487
    %711 = vmatpush.msra.mxu0 %v485
    %712 = vmatpush.msra.mxu0 %v483
    %713 = vmatpush.msra.mxu0 %v481
    %714 = vmatpush.msra.mxu0 %v479
    %715 = vmatpush.msra.mxu0 %v477
    %716 = vmatpush.msra.mxu0 %v475
    %717 = vmatpush.msra.mxu0 %v473
    %718 = vmatpush.msra.mxu0 %v471
    %719 = vmatpush.msra.mxu0 %v469
    %720 = vmatpush.msra.mxu0 %v467
    %721 = vmatpush.msra.mxu0 %v465
    %722 = vmatmul.f32.gmra.mxu0 %v639
    %v723 = vpop.f32.mrf.mxu0
    %v724 = vadd.f32 %v704, %v723
    %725 = vdwg.mxu0
    %vm726 = vcmp.gt.f32.partialorder %v684, 0.0
    %vm727 = vcmp.gt.f32.partialorder %v724, 0.0
    %v728 = vmul.f32 %v684, 0.2
    %v729 = vmul.f32 %v724, 0.2
    %v730 = vsel %vm726, %v684, %v728
    %v731 = vsel %vm727, %v724, %v729
    %v732 = vrot.slane %v592, 2
    %v733 = vrot.slane %v593, 2
    %736 = vmatpush.msra.mxu0 %v526
    %737 = vmatpush.msra.mxu0 %v524
    %738 = vmatpush.msra.mxu0 %v522
    %739 = vmatpush.msra.mxu0 %v520
    %740 = vmatpush.msra.mxu0 %v518
    %741 = vmatpush.msra.mxu0 %v516
    %742 = vmatpush.msra.mxu0 %v514
    %743 = vmatpush.msra.mxu0 %v512
    %744 = vmatpush.msra.mxu0 %v510
    %745 = vmatpush.msra.mxu0 %v508
    %746 = vmatpush.msra.mxu0 %v506
    %747 = vmatpush.msra.mxu0 %v504
    %748 = vmatpush.msra.mxu0 %v502
    %749 = vmatpush.msra.mxu0 %v500
    %750 = vmatpush.msra.mxu0 %v498
    %751 = vmatpush.msra.mxu0 %v496
    %752 = vmatmul.f32.gmra.mxu0 %v730
    %v753 = vpop.f32.mrf.mxu0
    %v754 = vadd.f32 %v732, %v753
    %755 = vdwg.mxu0
    %756 = vmatpush.msra.mxu0 %v558
    %757 = vmatpush.msra.mxu0 %v556
    %758 = vmatpush.msra.mxu0 %v554
    %759 = vmatpush.msra.mxu0 %v552
    %760 = vmatpush.msra.mxu0 %v550
    %761 = vmatpush.msra.mxu0 %v548
    %762 = vmatpush.msra.mxu0 %v546
    %763 = vmatpush.msra.mxu0 %v544
    %764 = vmatpush.msra.mxu0 %v542
    %765 = vmatpush.msra.mxu0 %v540
    %766 = vmatpush.msra.mxu0 %v538
    %767 = vmatpush.msra.mxu0 %v536
    %768 = vmatpush.msra.mxu0 %v534
    %769 = vmatpush.msra.mxu0 %v532
    %770 = vmatpush.msra.mxu0 %v530
    %771 = vmatpush.msra.mxu0 %v528
    %772 = vmatmul.f32.gmra.mxu0 %v731
    %v773 = vpop.f32.mrf.mxu0
    %v774 = vadd.f32 %v754, %v773
    %775 = vdwg.mxu0
    %776 = vmatpush.msra.mxu0 %v527
    %777 = vmatpush.msra.mxu0 %v525
    %778 = vmatpush.msra.mxu0 %v523
    %779 = vmatpush.msra.mxu0 %v521
    %780 = vmatpush.msra.mxu0 %v519
    %781 = vmatpush.msra.mxu0 %v517
    %782 = vmatpush.msra.mxu0 %v515
    %783 = vmatpush.msra.mxu0 %v513
    %784 = vmatpush.msra.mxu0 %v511
    %785 = vmatpush.msra.mxu0 %v509
    %786 = vmatpush.msra.mxu0 %v507
    %787 = vmatpush.msra.mxu0 %v505
    %788 = vmatpush.msra.mxu0 %v503
    %789 = vmatpush.msra.mxu0 %v501
    %790 = vmatpush.msra.mxu0 %v499
    %791 = vmatpush.msra.mxu0 %v497
    %792 = vmatmul.f32.gmra.mxu0 %v730
    %v793 = vpop.f32.mrf.mxu0
    %v794 = vadd.f32 %v733, %v793
    %795 = vdwg.mxu0
    %796 = vmatpush.msra.mxu0 %v559
    %797 = vmatpush.msra.mxu0 %v557
    %798 = vmatpush.msra.mxu0 %v555
    %799 = vmatpush.msra.mxu0 %v553
    %800 = vmatpush.msra.mxu0 %v551
    %801 = vmatpush.msra.mxu0 %v549
    %802 = vmatpush.msra.mxu0 %v547
    %803 = vmatpush.msra.mxu0 %v545
    %804 = vmatpush.msra.mxu0 %v543
    %805 = vmatpush.msra.mxu0 %v541
    %806 = vmatpush.msra.mxu0 %v539
    %807 = vmatpush.msra.mxu0 %v537
    %808 = vmatpush.msra.mxu0 %v535
    %809 = vmatpush.msra.mxu0 %v533
    %810 = vmatpush.msra.mxu0 %v531
    %811 = vmatpush.msra.mxu0 %v529
    %812 = vmatmul.f32.gmra.mxu0 %v731
    %v813 = vpop.f32.mrf.mxu0
    %v814 = vadd.f32 %v794, %v813
    %815 = vdwg.mxu0
    %vm816 = vcmp.gt.f32.partialorder %v774, 0.0
    %vm817 = vcmp.gt.f32.partialorder %v814, 0.0
    %v818 = vmul.f32 %v774, 0.2
    %v819 = vmul.f32 %v814, 0.2
    %v820 = vsel %vm816, %v774, %v818
    %v821 = vsel %vm817, %v814, %v819
    %v822 = vrot.slane %v592, 3
    %824 = vmatpush.msra.mxu0 %v575
    %825 = vmatpush.msra.mxu0 %v574
    %826 = vmatpush.msra.mxu0 %v573
    %827 = vmatpush.msra.mxu0 %v572
    %828 = vmatpush.msra.mxu0 %v571
    %829 = vmatpush.msra.mxu0 %v570
    %830 = vmatpush.msra.mxu0 %v569
    %831 = vmatpush.msra.mxu0 %v568
    %832 = vmatpush.msra.mxu0 %v567
    %833 = vmatpush.msra.mxu0 %v566
    %834 = vmatpush.msra.mxu0 %v565
    %835 = vmatpush.msra.mxu0 %v564
    %836 = vmatpush.msra.mxu0 %v563
    %837 = vmatpush.msra.mxu0 %v562
    %838 = vmatpush.msra.mxu0 %v561
    %839 = vmatpush.msra.mxu0 %v560
    %840 = vmatmul.f32.gmra.mxu0 %v820
    %v841 = vpop.f32.mrf.mxu0
    %v842 = vadd.f32 %v822, %v841
    %843 = vdwg.mxu0
    %844 = vmatpush.msra.mxu0 %v591
    %845 = vmatpush.msra.mxu0 %v590
    %846 = vmatpush.msra.mxu0 %v589
    %847 = vmatpush.msra.mxu0 %v588
    %848 = vmatpush.msra.mxu0 %v587
    %849 = vmatpush.msra.mxu0 %v586
    %850 = vmatpush.msra.mxu0 %v585
    %851 = vmatpush.msra.mxu0 %v584
    %852 = vmatpush.msra.mxu0 %v583
    %853 = vmatpush.msra.mxu0 %v582
    %854 = vmatpush.msra.mxu0 %v581
    %855 = vmatpush.msra.mxu0 %v580
    %856 = vmatpush.msra.mxu0 %v579
    %857 = vmatpush.msra.mxu0 %v578
    %858 = vmatpush.msra.mxu0 %v577
    %859 = vmatpush.msra.mxu0 %v576
    %860 = vmatmul.f32.gmra.mxu0 %v821
    %v861 = vpop.f32.mrf.mxu0
    %v862 = vadd.f32 %v842, %v861
    %863 = vdwg.mxu0
    %vm864 = vcmp.lt.s32.totalorder %v28, 4
    %v865 = vsel %vm864, %v862, -1e+30
    %vm866 = vcmask 1040384
    %v867 = vsel %vm866, %v865, -inf
    %868 = vmax.xlane.f32.xlu0 %v867
    %v869 = vpop.xlane.xlu0 %868
    %v870 = vsub.f32 %v865, %v869
    %v871 = vmul.f32 %v870, 1.442695
    %v872 = vpow.pop %v871
    %v873 = vsel %vm866, %v872, 0.0
    %874 = vadd.xlane.f32.xlu0 %v873
    %v875 = vpop.xlane.xlu0 %874
    %v876 = vrcp.pop %v875
    %v877 = vmul.f32 %v872, %v876
    %vm878 = vcmp.eq.s32.totalorder %v28, 4
    %v879 = vsel %vm878, %v862, %v877
    %880 = vst [vmem:[%s2] sm:$0x1] %v879
    // Predicated region
    $region14: #{actor_critic_forward.1} parent=1 // pred_check
      _
    $region15: #{actor_critic_forward.1} parent=1 // pred_check_branch
      %882 = sbr.rel (0) target = $region17
    $region16: #{actor_critic_forward.1} parent=1 // pred_region
      _
    $region17: #{actor_critic_forward.1} parent=1 // pred_fallthru
      _
    // Predicated region
    $region18: #{actor_critic_forward.1} parent=1 // pred_check
      _
    $region19: #{actor_critic_forward.1} parent=1 // pred_check_branch
      %884 = sbr.rel (0) target = $region21
    $region20: #{actor_critic_forward.1} parent=1 // pred_region
      _
    $region21: #{actor_critic_forward.1} parent=1 // pred_fallthru
      _
    %885 = vsyncpa [#allocation3], 1

</llo_original>
